<compile_context>
chip_gen: v6e
topology: v6e:2x2x1
jax: 0.10.0
libtpu: 0.0.40
codegen_flags: <defaults>
</compile_context>

<pallas_src>
import jax
import jax.numpy as jnp
from jax.experimental import pallas as pl
from jax.experimental.pallas import tpu as pltpu

NEG_SLOPE = 0.01   # PyTorch nn.LeakyReLU default negative_slope
LANE = 128


def _round_up(n, m):
    return ((n + m - 1) // m) * m


def _pad2(a, rows, cols):
    return jnp.pad(a, ((0, rows - a.shape[0]), (0, cols - a.shape[1])))


def _batch_dim_semantics():
    """Review (v7x): 'parallel' does not shard a grid axis across v7x's two
    TensorCores; CORE_PARALLEL does.  Enable it only on v7x-class chips."""
    try:
        kind = getattr(jax.devices()[0], "device_kind", "").lower()
    except Exception:  # pragma: no cover - defensive
        kind = ""
    core_parallel = getattr(pltpu, "CORE_PARALLEL", None)
    if "v7" in kind and core_parallel is not None:
        return (core_parallel,)
    return ("parallel",)


def predictor_kernel(x_ref,
                     w0_ref, b0_ref,
                     w1_ref, b1_ref,
                     w2_ref, b2_ref,
                     w3_ref, b3_ref,
                     w4_ref, b4_ref,
                     wr_ref, br_ref,
                     out_ref):
    """One batch tile: x (tb, E) f32 -> out (tb, 1) f32."""
    compute_dtype = w0_ref.dtype
    h = x_ref[...].astype(compute_dtype)             # in-kernel f32 -> bf16 cast

    for w_ref, b_ref in ((w0_ref, b0_ref), (w1_ref, b1_ref), (w2_ref, b2_ref),
                         (w3_ref, b3_ref), (w4_ref, b4_ref)):
        acc = jnp.dot(h, w_ref[...], preferred_element_type=jnp.float32)  # MXU
        acc = acc + b_ref[...]                        # f32 bias add (VPU)
        acc = jnp.where(acc >= 0, acc, NEG_SLOPE * acc)   # LeakyReLU (VPU)
        # TODO(synk): nn.Dropout(p=0.2) is identity in eval mode; skipped.
        h = acc.astype(compute_dtype)

    # Regressor: standard (tb, Hp) x (Hp, 1) matmul -> (tb, 1); tanh on EUP.
    out = jnp.dot(h, wr_ref[...], preferred_element_type=jnp.float32)
    out_ref[...] = jnp.tanh(out + br_ref[...]).astype(out_ref.dtype)


def prepare_params(params, *, compute_dtype=jnp.bfloat16):
    """One-time pad/cast of weights (outside the hot path).

    Hidden dim is zero-padded to a multiple of 128 lanes; zero weights/biases
    in the padded hidden units keep the math exact."""
    E, H = params["w0"].shape
    Hp = _round_up(H, LANE)
    prep = {
        "w0": _pad2(params["w0"], E, Hp).astype(compute_dtype),      # (E, Hp)
        "b0": _pad2(params["b0"], 1, Hp).astype(jnp.float32),        # (1, Hp)
    }
    for i in range(1, 5):
        prep[f"w{i}"] = _pad2(params[f"w{i}"], Hp, Hp).astype(compute_dtype)
        prep[f"b{i}"] = _pad2(params[f"b{i}"], 1, Hp).astype(jnp.float32)
    prep["wr"] = _pad2(params["wr"], Hp, 1).astype(compute_dtype)     # (Hp, 1)
    prep["br"] = params["br"].astype(jnp.float32)                     # (1, 1)
    return prep


def predictor_forward(x, prep, *, tile_b=2048):
    """x: (B, E) float32.  prep: dict from prepare_params.  Returns (B, 1) f32."""
    B, E = x.shape
    assert tile_b % 128 == 0, "tile_b must be a multiple of 128"

    if B <= tile_b:
        tb, nb = B, 1                      # single full-extent block, no padding
    else:
        tb, nb = tile_b, pl.cdiv(B, tile_b)   # final block may be ragged (masked)

    flat_args = [x]
    for i in range(5):
        flat_args += [prep[f"w{i}"], prep[f"b{i}"]]
    flat_args += [prep["wr"], prep["br"]]

    def _resident_spec(a):
        # Constant block index for every grid step => DMA'd once, VMEM-resident.
        return pl.BlockSpec(a.shape, lambda b: (0, 0))

    in_specs = [pl.BlockSpec((tb, E), lambda b: (b, 0))]
    in_specs += [_resident_spec(a) for a in flat_args[1:]]

    out = pl.pallas_call(
        predictor_kernel,
        out_shape=jax.ShapeDtypeStruct((B, 1), jnp.float32),
        grid=(nb,),
        in_specs=in_specs,
        out_specs=pl.BlockSpec((tb, 1), lambda b: (b, 0)),
        compiler_params=pltpu.CompilerParams(
            dimension_semantics=_batch_dim_semantics()),
    )(*flat_args)
    return out                              # (B, 1) float32


def init_params(key, embedding_size, mlp_hidden_size):
    """Deterministic synthetic init, roughly matching PyTorch U(-1/sqrt(fan_in), +)."""
    params = {}
    dims_in = [embedding_size] + [mlp_hidden_size] * 4
    keys = jax.random.split(key, 2 * 5 + 2)
    k = 0
    for i, fan_in in enumerate(dims_in):
        bound = 1.0 / jnp.sqrt(jnp.float32(fan_in))
        params[f"w{i}"] = jax.random.uniform(
            keys[k], (fan_in, mlp_hidden_size), jnp.float32, -bound, bound); k += 1
        params[f"b{i}"] = jax.random.uniform(
            keys[k], (1, mlp_hidden_size), jnp.float32, -bound, bound); k += 1
    bound = 1.0 / jnp.sqrt(jnp.float32(mlp_hidden_size))
    params["wr"] = jax.random.uniform(
        keys[k], (mlp_hidden_size, 1), jnp.float32, -bound, bound); k += 1
    params["br"] = jax.random.uniform(
        keys[k], (1, 1), jnp.float32, -bound, bound)
    return params


def reference_forward(x, params, compute_dtype=jnp.bfloat16):
    """Pure-JAX reference with the same bf16-input / f32-accumulate math."""
    h = x.astype(compute_dtype)
    for i in range(5):
        w = params[f"w{i}"].astype(compute_dtype)
        a = jnp.dot(h, w, preferred_element_type=jnp.float32) + params[f"b{i}"]
        a = jnp.where(a >= 0, a, NEG_SLOPE * a)
        h = a.astype(compute_dtype)
    wr = params["wr"].astype(compute_dtype)
    out = jnp.dot(h, wr, preferred_element_type=jnp.float32) + params["br"]
    return jnp.tanh(out)


if __name__ == "__main__":
    EMBEDDING_SIZE = 32
    MLP_HIDDEN_SIZE = 2 * EMBEDDING_SIZE     # module default: embedding_size * 2
    BATCH = 8

    key = jax.random.PRNGKey(0)
    kx, kp = jax.random.split(key)
    x = jax.random.normal(kx, (BATCH, EMBEDDING_SIZE), jnp.float32)
    params = init_params(kp, EMBEDDING_SIZE, MLP_HIDDEN_SIZE)
    prep = prepare_params(params)            # one-time pad/cast, hot path is clean

    # Small batch: single full-extent block (tb = B = 8).
    y = jax.block_until_ready(predictor_forward(x, prep))
    y_ref = reference_forward(x, params)
    assert y.shape == (BATCH, 1)
    assert jnp.allclose(y, y_ref, atol=2e-3, rtol=2e-3), \
        float(jnp.max(jnp.abs(y - y_ref)))

    # Medium batch, default tile: single full-extent block with tb = 300.
    x2 = jax.random.normal(jax.random.PRNGKey(1), (300, EMBEDDING_SIZE), jnp.float32)
    y2 = jax.block_until_ready(predictor_forward(x2, prep))
    y2_ref = reference_forward(x2, params)
    assert y2.shape == (300, 1)
    assert jnp.allclose(y2, y2_ref, atol=2e-3, rtol=2e-3), \
        float(jnp.max(jnp.abs(y2 - y2_ref)))

    # Multi-tile batch grid with a ragged final block (tb = 128, grid = 3).
    y3 = jax.block_until_ready(predictor_forward(x2, prep, tile_b=128))
    assert y3.shape == (300, 1)
    assert jnp.allclose(y3, y2_ref, atol=2e-3, rtol=2e-3), \
        float(jnp.max(jnp.abs(y3 - y2_ref)))

    print("KERNEL_OK")
</pallas_src>

<mosaic_0001>
module attributes {stable_mosaic.version = 11 : i64} {
  func.func @predictor_kernel(%arg0: i32, %arg1: memref<8x32xf32, #tpu.memory_space<vmem>>, %arg2: memref<32x128xbf16, #tpu.memory_space<vmem>>, %arg3: memref<1x128xf32, #tpu.memory_space<vmem>>, %arg4: memref<128x128xbf16, #tpu.memory_space<vmem>>, %arg5: memref<1x128xf32, #tpu.memory_space<vmem>>, %arg6: memref<128x128xbf16, #tpu.memory_space<vmem>>, %arg7: memref<1x128xf32, #tpu.memory_space<vmem>>, %arg8: memref<128x128xbf16, #tpu.memory_space<vmem>>, %arg9: memref<1x128xf32, #tpu.memory_space<vmem>>, %arg10: memref<128x128xbf16, #tpu.memory_space<vmem>>, %arg11: memref<1x128xf32, #tpu.memory_space<vmem>>, %arg12: memref<128x1xbf16, #tpu.memory_space<vmem>>, %arg13: memref<1x1xf32, #tpu.memory_space<vmem>>, %arg14: memref<8x1xf32, #tpu.memory_space<vmem>>) attributes {dimension_semantics = [#tpu.dimension_semantics<parallel>], iteration_bounds = array<i64: 1>, scalar_prefetch = 0 : i64, scratch_operands = 0 : i64, tpu.core_type = #tpu.core_type<tc>, window_params = [{transform_indices = @transform_0, window_bounds = array<i64: 8, 32>}, {pipeline_mode = #tpu.pipeline_mode<synchronous>, transform_indices = @transform_1, window_bounds = array<i64: 32, 128>}, {pipeline_mode = #tpu.pipeline_mode<synchronous>, transform_indices = @transform_2, window_bounds = array<i64: 1, 128>}, {pipeline_mode = #tpu.pipeline_mode<synchronous>, transform_indices = @transform_3, window_bounds = array<i64: 128, 128>}, {pipeline_mode = #tpu.pipeline_mode<synchronous>, transform_indices = @transform_4, window_bounds = array<i64: 1, 128>}, {pipeline_mode = #tpu.pipeline_mode<synchronous>, transform_indices = @transform_5, window_bounds = array<i64: 128, 128>}, {pipeline_mode = #tpu.pipeline_mode<synchronous>, transform_indices = @transform_6, window_bounds = array<i64: 1, 128>}, {pipeline_mode = #tpu.pipeline_mode<synchronous>, transform_indices = @transform_7, window_bounds = array<i64: 128, 128>}, {pipeline_mode = #tpu.pipeline_mode<synchronous>, transform_indices = @transform_8, window_bounds = array<i64: 1, 128>}, {pipeline_mode = #tpu.pipeline_mode<synchronous>, transform_indices = @transform_9, window_bounds = array<i64: 128, 128>}, {pipeline_mode = #tpu.pipeline_mode<synchronous>, transform_indices = @transform_10, window_bounds = array<i64: 1, 128>}, {pipeline_mode = #tpu.pipeline_mode<synchronous>, transform_indices = @transform_11, window_bounds = array<i64: 128, 1>}, {pipeline_mode = #tpu.pipeline_mode<synchronous>, transform_indices = @transform_12, window_bounds = array<i64: 1, 1>}, {transform_indices = @transform_13, window_bounds = array<i64: 8, 1>}]} {
    %c0 = arith.constant 0 : index
    %c0_0 = arith.constant 0 : index
    %0 = vector.load %arg1[%c0, %c0_0] : memref<8x32xf32, #tpu.memory_space<vmem>>, vector<8x32xf32>
    %1 = arith.truncf %0 : vector<8x32xf32> to vector<8x32xbf16>
    %c0_1 = arith.constant 0 : index
    %c0_2 = arith.constant 0 : index
    %2 = vector.load %arg2[%c0_1, %c0_2] : memref<32x128xbf16, #tpu.memory_space<vmem>>, vector<32x128xbf16>
    %cst = arith.constant dense<0.000000e+00> : vector<8x128xf32>
    %3 = tpu.matmul %1, %2, %cst {dimension_numbers = #tpu.dot_dimension_numbers<[1], [0], [0], [1], [0, 0, 1, 1], [], []>} : vector<8x32xbf16>, vector<32x128xbf16>, vector<8x128xf32> -> vector<8x128xf32>
    %c0_3 = arith.constant 0 : index
    %c0_4 = arith.constant 0 : index
    %4 = vector.load %arg3[%c0_3, %c0_4] : memref<1x128xf32, #tpu.memory_space<vmem>>, vector<1x128xf32>
    %5 = vector.broadcast %4 : vector<1x128xf32> to vector<8x128xf32>
    %6 = arith.addf %3, %5 : vector<8x128xf32>
    %cst_5 = arith.constant 0.000000e+00 : f32
    %7 = vector.broadcast %cst_5 : f32 to vector<8x128xf32>
    %8 = arith.cmpf oge, %6, %7 : vector<8x128xf32>
    %cst_6 = arith.constant 0.00999999977 : f32
    %9 = vector.broadcast %cst_6 : f32 to vector<8x128xf32>
    %10 = arith.mulf %9, %6 : vector<8x128xf32>
    %11 = arith.select %8, %6, %10 : vector<8x128xi1>, vector<8x128xf32>
    %12 = arith.truncf %11 : vector<8x128xf32> to vector<8x128xbf16>
    %c0_7 = arith.constant 0 : index
    %c0_8 = arith.constant 0 : index
    %13 = vector.load %arg4[%c0_7, %c0_8] : memref<128x128xbf16, #tpu.memory_space<vmem>>, vector<128x128xbf16>
    %cst_9 = arith.constant dense<0.000000e+00> : vector<8x128xf32>
    %14 = tpu.matmul %12, %13, %cst_9 {dimension_numbers = #tpu.dot_dimension_numbers<[1], [0], [0], [1], [0, 0, 1, 1], [], []>} : vector<8x128xbf16>, vector<128x128xbf16>, vector<8x128xf32> -> vector<8x128xf32>
    %c0_10 = arith.constant 0 : index
    %c0_11 = arith.constant 0 : index
    %15 = vector.load %arg5[%c0_10, %c0_11] : memref<1x128xf32, #tpu.memory_space<vmem>>, vector<1x128xf32>
    %16 = vector.broadcast %15 : vector<1x128xf32> to vector<8x128xf32>
    %17 = arith.addf %14, %16 : vector<8x128xf32>
    %cst_12 = arith.constant 0.000000e+00 : f32
    %18 = vector.broadcast %cst_12 : f32 to vector<8x128xf32>
    %19 = arith.cmpf oge, %17, %18 : vector<8x128xf32>
    %cst_13 = arith.constant 0.00999999977 : f32
    %20 = vector.broadcast %cst_13 : f32 to vector<8x128xf32>
    %21 = arith.mulf %20, %17 : vector<8x128xf32>
    %22 = arith.select %19, %17, %21 : vector<8x128xi1>, vector<8x128xf32>
    %23 = arith.truncf %22 : vector<8x128xf32> to vector<8x128xbf16>
    %c0_14 = arith.constant 0 : index
    %c0_15 = arith.constant 0 : index
    %24 = vector.load %arg6[%c0_14, %c0_15] : memref<128x128xbf16, #tpu.memory_space<vmem>>, vector<128x128xbf16>
    %cst_16 = arith.constant dense<0.000000e+00> : vector<8x128xf32>
    %25 = tpu.matmul %23, %24, %cst_16 {dimension_numbers = #tpu.dot_dimension_numbers<[1], [0], [0], [1], [0, 0, 1, 1], [], []>} : vector<8x128xbf16>, vector<128x128xbf16>, vector<8x128xf32> -> vector<8x128xf32>
    %c0_17 = arith.constant 0 : index
    %c0_18 = arith.constant 0 : index
    %26 = vector.load %arg7[%c0_17, %c0_18] : memref<1x128xf32, #tpu.memory_space<vmem>>, vector<1x128xf32>
    %27 = vector.broadcast %26 : vector<1x128xf32> to vector<8x128xf32>
    %28 = arith.addf %25, %27 : vector<8x128xf32>
    %cst_19 = arith.constant 0.000000e+00 : f32
    %29 = vector.broadcast %cst_19 : f32 to vector<8x128xf32>
    %30 = arith.cmpf oge, %28, %29 : vector<8x128xf32>
    %cst_20 = arith.constant 0.00999999977 : f32
    %31 = vector.broadcast %cst_20 : f32 to vector<8x128xf32>
    %32 = arith.mulf %31, %28 : vector<8x128xf32>
    %33 = arith.select %30, %28, %32 : vector<8x128xi1>, vector<8x128xf32>
    %34 = arith.truncf %33 : vector<8x128xf32> to vector<8x128xbf16>
    %c0_21 = arith.constant 0 : index
    %c0_22 = arith.constant 0 : index
    %35 = vector.load %arg8[%c0_21, %c0_22] : memref<128x128xbf16, #tpu.memory_space<vmem>>, vector<128x128xbf16>
    %cst_23 = arith.constant dense<0.000000e+00> : vector<8x128xf32>
    %36 = tpu.matmul %34, %35, %cst_23 {dimension_numbers = #tpu.dot_dimension_numbers<[1], [0], [0], [1], [0, 0, 1, 1], [], []>} : vector<8x128xbf16>, vector<128x128xbf16>, vector<8x128xf32> -> vector<8x128xf32>
    %c0_24 = arith.constant 0 : index
    %c0_25 = arith.constant 0 : index
    %37 = vector.load %arg9[%c0_24, %c0_25] : memref<1x128xf32, #tpu.memory_space<vmem>>, vector<1x128xf32>
    %38 = vector.broadcast %37 : vector<1x128xf32> to vector<8x128xf32>
    %39 = arith.addf %36, %38 : vector<8x128xf32>
    %cst_26 = arith.constant 0.000000e+00 : f32
    %40 = vector.broadcast %cst_26 : f32 to vector<8x128xf32>
    %41 = arith.cmpf oge, %39, %40 : vector<8x128xf32>
    %cst_27 = arith.constant 0.00999999977 : f32
    %42 = vector.broadcast %cst_27 : f32 to vector<8x128xf32>
    %43 = arith.mulf %42, %39 : vector<8x128xf32>
    %44 = arith.select %41, %39, %43 : vector<8x128xi1>, vector<8x128xf32>
    %45 = arith.truncf %44 : vector<8x128xf32> to vector<8x128xbf16>
    %c0_28 = arith.constant 0 : index
    %c0_29 = arith.constant 0 : index
    %46 = vector.load %arg10[%c0_28, %c0_29] : memref<128x128xbf16, #tpu.memory_space<vmem>>, vector<128x128xbf16>
    %cst_30 = arith.constant dense<0.000000e+00> : vector<8x128xf32>
    %47 = tpu.matmul %45, %46, %cst_30 {dimension_numbers = #tpu.dot_dimension_numbers<[1], [0], [0], [1], [0, 0, 1, 1], [], []>} : vector<8x128xbf16>, vector<128x128xbf16>, vector<8x128xf32> -> vector<8x128xf32>
    %c0_31 = arith.constant 0 : index
    %c0_32 = arith.constant 0 : index
    %48 = vector.load %arg11[%c0_31, %c0_32] : memref<1x128xf32, #tpu.memory_space<vmem>>, vector<1x128xf32>
    %49 = vector.broadcast %48 : vector<1x128xf32> to vector<8x128xf32>
    %50 = arith.addf %47, %49 : vector<8x128xf32>
    %cst_33 = arith.constant 0.000000e+00 : f32
    %51 = vector.broadcast %cst_33 : f32 to vector<8x128xf32>
    %52 = arith.cmpf oge, %50, %51 : vector<8x128xf32>
    %cst_34 = arith.constant 0.00999999977 : f32
    %53 = vector.broadcast %cst_34 : f32 to vector<8x128xf32>
    %54 = arith.mulf %53, %50 : vector<8x128xf32>
    %55 = arith.select %52, %50, %54 : vector<8x128xi1>, vector<8x128xf32>
    %56 = arith.truncf %55 : vector<8x128xf32> to vector<8x128xbf16>
    %c0_35 = arith.constant 0 : index
    %c0_36 = arith.constant 0 : index
    %57 = vector.load %arg12[%c0_35, %c0_36] : memref<128x1xbf16, #tpu.memory_space<vmem>>, vector<128x1xbf16>
    %cst_37 = arith.constant dense<0.000000e+00> : vector<8x1xf32>
    %58 = tpu.matmul %56, %57, %cst_37 {dimension_numbers = #tpu.dot_dimension_numbers<[1], [0], [0], [1], [0, 0, 1, 1], [], []>} : vector<8x128xbf16>, vector<128x1xbf16>, vector<8x1xf32> -> vector<8x1xf32>
    %c0_38 = arith.constant 0 : index
    %c0_39 = arith.constant 0 : index
    %59 = vector.load %arg13[%c0_38, %c0_39] : memref<1x1xf32, #tpu.memory_space<vmem>>, vector<1x1xf32>
    %60 = vector.broadcast %59 : vector<1x1xf32> to vector<8x1xf32>
    %61 = arith.addf %58, %60 : vector<8x1xf32>
    %62 = math.tanh %61 : vector<8x1xf32>
    %c0_40 = arith.constant 0 : index
    %c0_41 = arith.constant 0 : index
    %63 = vector.load %arg14[%c0_40, %c0_41] : memref<8x1xf32, #tpu.memory_space<vmem>>, vector<8x1xf32>
    tpu.vector_store %arg14[%c0_40, %c0_41], %62 {strides = array<i32>} : memref<8x1xf32, #tpu.memory_space<vmem>>, vector<8x1xf32>,
    return
  }
  func.func @transform_0(%arg0: i32) -> (i32, i32) {
    %c0_i32 = arith.constant 0 : i32
    %c0_i32_0 = arith.constant 0 : i32
    return %arg0, %c0_i32 : i32, i32
  }
  func.func @transform_1(%arg0: i32) -> (i32, i32) {
    %c0_i32 = arith.constant 0 : i32
    %c0_i32_0 = arith.constant 0 : i32
    %c0_i32_1 = arith.constant 0 : i32
    return %c0_i32, %c0_i32_0 : i32, i32
  }
  func.func @transform_2(%arg0: i32) -> (i32, i32) {
    %c0_i32 = arith.constant 0 : i32
    %c0_i32_0 = arith.constant 0 : i32
    %c0_i32_1 = arith.constant 0 : i32
    return %c0_i32, %c0_i32_0 : i32, i32
  }
  func.func @transform_3(%arg0: i32) -> (i32, i32) {
    %c0_i32 = arith.constant 0 : i32
    %c0_i32_0 = arith.constant 0 : i32
    %c0_i32_1 = arith.constant 0 : i32
    return %c0_i32, %c0_i32_0 : i32, i32
  }
  func.func @transform_4(%arg0: i32) -> (i32, i32) {
    %c0_i32 = arith.constant 0 : i32
    %c0_i32_0 = arith.constant 0 : i32
    %c0_i32_1 = arith.constant 0 : i32
    return %c0_i32, %c0_i32_0 : i32, i32
  }
  func.func @transform_5(%arg0: i32) -> (i32, i32) {
    %c0_i32 = arith.constant 0 : i32
    %c0_i32_0 = arith.constant 0 : i32
    %c0_i32_1 = arith.constant 0 : i32
    return %c0_i32, %c0_i32_0 : i32, i32
  }
  func.func @transform_6(%arg0: i32) -> (i32, i32) {
    %c0_i32 = arith.constant 0 : i32
    %c0_i32_0 = arith.constant 0 : i32
    %c0_i32_1 = arith.constant 0 : i32
    return %c0_i32, %c0_i32_0 : i32, i32
  }
  func.func @transform_7(%arg0: i32) -> (i32, i32) {
    %c0_i32 = arith.constant 0 : i32
    %c0_i32_0 = arith.constant 0 : i32
    %c0_i32_1 = arith.constant 0 : i32
    return %c0_i32, %c0_i32_0 : i32, i32
  }
  func.func @transform_8(%arg0: i32) -> (i32, i32) {
    %c0_i32 = arith.constant 0 : i32
    %c0_i32_0 = arith.constant 0 : i32
    %c0_i32_1 = arith.constant 0 : i32
    return %c0_i32, %c0_i32_0 : i32, i32
  }
  func.func @transform_9(%arg0: i32) -> (i32, i32) {
    %c0_i32 = arith.constant 0 : i32
    %c0_i32_0 = arith.constant 0 : i32
    %c0_i32_1 = arith.constant 0 : i32
    return %c0_i32, %c0_i32_0 : i32, i32
  }
  func.func @transform_10(%arg0: i32) -> (i32, i32) {
    %c0_i32 = arith.constant 0 : i32
    %c0_i32_0 = arith.constant 0 : i32
    %c0_i32_1 = arith.constant 0 : i32
    return %c0_i32, %c0_i32_0 : i32, i32
  }
  func.func @transform_11(%arg0: i32) -> (i32, i32) {
    %c0_i32 = arith.constant 0 : i32
    %c0_i32_0 = arith.constant 0 : i32
    %c0_i32_1 = arith.constant 0 : i32
    return %c0_i32, %c0_i32_0 : i32, i32
  }
  func.func @transform_12(%arg0: i32) -> (i32, i32) {
    %c0_i32 = arith.constant 0 : i32
    %c0_i32_0 = arith.constant 0 : i32
    %c0_i32_1 = arith.constant 0 : i32
    return %c0_i32, %c0_i32_0 : i32, i32
  }
  func.func @transform_13(%arg0: i32) -> (i32, i32) {
    %c0_i32 = arith.constant 0 : i32
    %c0_i32_0 = arith.constant 0 : i32
    return %arg0, %c0_i32 : i32, i32
  }
}

</mosaic_0001>

<llo_original>
// kernel: tpu_custom_call.1
$region0: #{tpu_custom_call.1}
  #allocation0 [shape = 'u32[]', space=smem, size = 0x4, offset = 0x4, fixed_abs, tag = 'smem constant byte address 0x4 - core index']
  #allocation1 [shape = 'u32[144,128]{1,0:T(1,128)}', space=vmem, size = 0x12000, scoped, tag = 'internal scratch']
  #allocation2 [shape = 'f32[1,1]{1,0:T(1,128)S(1)}', space=vmem, size = 0x200, scoped, tag = 'scoped memory for tpu_custom_call.1']
  %s0 = inlined_call_operand.vmem [shape: f32[8,32], index: 0, kind: input, shape index: {}]
  %s1 = inlined_call_operand.hbm [shape: bf16[32,128], index: 1, kind: input, shape index: {}]
  %s2 = inlined_call_operand.hbm [shape: f32[1,128], index: 2, kind: input, shape index: {}]
  %s3 = inlined_call_operand.vmem [shape: bf16[128,128], index: 3, kind: input, shape index: {}]
  %s4 = inlined_call_operand.vmem [shape: f32[1,128], index: 4, kind: input, shape index: {}]
  %s5 = inlined_call_operand.hbm [shape: bf16[128,128], index: 5, kind: input, shape index: {}]
  %s6 = inlined_call_operand.vmem [shape: f32[1,128], index: 6, kind: input, shape index: {}]
  %s7 = inlined_call_operand.hbm [shape: bf16[128,128], index: 7, kind: input, shape index: {}]
  %s8 = inlined_call_operand.vmem [shape: f32[1,128], index: 8, kind: input, shape index: {}]
  %s9 = inlined_call_operand.hbm [shape: bf16[128,128], index: 9, kind: input, shape index: {}]
  %s10 = inlined_call_operand.vmem [shape: f32[1,128], index: 10, kind: input, shape index: {}]
  %s11 = inlined_call_operand.vmem [shape: bf16[128,1], index: 11, kind: input, shape index: {}]
  %s12 = inlined_call_operand.<no memory space> [shape: f32[1,1], index: 12, kind: input, shape index: {}]
  %s13 = inlined_call_operand.vmem [shape: f32[8,1], index: 13, kind: output, shape index: {}]
  %s14 = sld [smem:[#allocation0]]
  $region82: #{tpu_custom_call.1} parent=0
    _
  %s16 = ssub.s32 1, %s14
  %s17 = scalar_select 0, %s16, %s14
  %v18 = vstv %s12
  %19 = vst [vmem:[#allocation2] sm:$0x1] %v18
  $region1: #{tpu_custom_call.1} parent=0
    #allocation3 [shape = 'u8[8192]{0}', space=vmem, size = 0x2000, scoped, tag = 'input window, operand 1, single buffered']
    #allocation4 [shape = 's32[1]{0}', space=sflag, size = 0x4, scoped, tag = 'scoped memory for tpu_custom_call.1']
    #allocation5 [shape = 'u8[512]{0}', space=vmem, size = 0x400, scoped, tag = 'input window, operand 2, single buffered']
    #allocation6 [shape = 's32[1]{0}', space=sflag, size = 0x4, scoped, tag = 'scoped memory for tpu_custom_call.1']
    #allocation7 [shape = 'u8[32768]{0}', space=vmem, size = 0x8000, scoped, tag = 'input window, operand 5, single buffered']
    #allocation8 [shape = 'u8[32768]{0}', space=vmem, size = 0x8000, scoped, tag = 'input window, operand 7, single buffered']
    #allocation9 [shape = 's32[1]{0}', space=sflag, size = 0x4, scoped, tag = 'scoped memory for tpu_custom_call.1']
    #allocation10 [shape = 'u8[32768]{0}', space=vmem, size = 0x8000, scoped, tag = 'input window, operand 9, single buffered']
    %20 = vsyncpa [#allocation4], 0
    %21 = vsyncpa [#allocation6], 0
    %22 = vsyncpa [#allocation9], 0
    // Predicated region
    $region2: #{tpu_custom_call.1} parent=1 // pred_check
      _
    $region3: #{tpu_custom_call.1} parent=1 // pred_check_branch
      %24 = sbr.rel (0) target = $region5
    $region4: #{tpu_custom_call.1} parent=1 // pred_region
      _
    $region5: #{tpu_custom_call.1} parent=1 // pred_fallthru
      _
    // Predicated region
    $region6: #{tpu_custom_call.1} parent=1 // pred_check
      _
    $region7: #{tpu_custom_call.1} parent=1 // pred_check_branch
      %26 = sbr.rel (0) target = $region9
    $region8: #{tpu_custom_call.1} parent=1 // pred_region
      %s28 = ssub.s32 256, 256
      %29 = vsyncadd [#allocation4], %s28
      %s30 = sshll.u32 [#allocation3], 4
      %s31 = int_to_ptr.vmem [resolvable:$true] %s30
      %36 = dma.hbm_to_vmem [thread:$0]  %s1, 256, %s31, [#allocation4], 64, 64, 4
    $region9: #{tpu_custom_call.1} parent=1 // pred_fallthru
      _
    // Predicated region
    $region10: #{tpu_custom_call.1} parent=1 // pred_check
      _
    $region11: #{tpu_custom_call.1} parent=1 // pred_check_branch
      %38 = sbr.rel (0) target = $region13
    $region12: #{tpu_custom_call.1} parent=1 // pred_region
      %s40 = ssub.s32 16, 16
      %41 = vsyncadd [#allocation6], %s40
      %s43 = sshll.u32 [#allocation5], 4
      %s44 = int_to_ptr.vmem [resolvable:$true] %s43
      %46 = dma.hbm_to_vmem [thread:$0]  %s2, 16, %s44, [#allocation6]
    $region13: #{tpu_custom_call.1} parent=1 // pred_fallthru
      _
    // Predicated region
    $region14: #{tpu_custom_call.1} parent=1 // pred_check
      _
    $region15: #{tpu_custom_call.1} parent=1 // pred_check_branch
      %48 = sbr.rel (0) target = $region17
    $region16: #{tpu_custom_call.1} parent=1 // pred_region
      _
    $region17: #{tpu_custom_call.1} parent=1 // pred_fallthru
      _
    // Predicated region
    $region18: #{tpu_custom_call.1} parent=1 // pred_check
      _
    $region19: #{tpu_custom_call.1} parent=1 // pred_check_branch
      %50 = sbr.rel (0) target = $region21
    $region20: #{tpu_custom_call.1} parent=1 // pred_region
      _
    $region21: #{tpu_custom_call.1} parent=1 // pred_fallthru
      _
    // Predicated region
    $region22: #{tpu_custom_call.1} parent=1 // pred_check
      _
    $region23: #{tpu_custom_call.1} parent=1 // pred_check_branch
      %52 = sbr.rel (0) target = $region25
    $region24: #{tpu_custom_call.1} parent=1 // pred_region
      %s54 = ssub.s32 1024, 1024
      %55 = vsyncadd [#allocation6], %s54
      %s56 = sshll.u32 [#allocation7], 4
      %s57 = int_to_ptr.vmem [resolvable:$true] %s56
      %62 = dma.hbm_to_vmem [thread:$0]  %s5, 1024, %s57, [#allocation6], 64, 64, 4
    $region25: #{tpu_custom_call.1} parent=1 // pred_fallthru
      _
    // Predicated region
    $region26: #{tpu_custom_call.1} parent=1 // pred_check
      _
    $region27: #{tpu_custom_call.1} parent=1 // pred_check_branch
      %64 = sbr.rel (0) target = $region29
    $region28: #{tpu_custom_call.1} parent=1 // pred_region
      _
    $region29: #{tpu_custom_call.1} parent=1 // pred_fallthru
      _
    // Predicated region
    $region30: #{tpu_custom_call.1} parent=1 // pred_check
      _
    $region31: #{tpu_custom_call.1} parent=1 // pred_check_branch
      %66 = sbr.rel (0) target = $region33
    $region32: #{tpu_custom_call.1} parent=1 // pred_region
      %s68 = ssub.s32 1024, 1024
      %69 = vsyncadd [#allocation9], %s68
      %s70 = sshll.u32 [#allocation8], 4
      %s71 = int_to_ptr.vmem [resolvable:$true] %s70
      %76 = dma.hbm_to_vmem [thread:$0]  %s7, 1024, %s71, [#allocation9], 64, 64, 4
    $region33: #{tpu_custom_call.1} parent=1 // pred_fallthru
      _
    // Predicated region
    $region34: #{tpu_custom_call.1} parent=1 // pred_check
      _
    $region35: #{tpu_custom_call.1} parent=1 // pred_check_branch
      %78 = sbr.rel (0) target = $region37
    $region36: #{tpu_custom_call.1} parent=1 // pred_region
      _
    $region37: #{tpu_custom_call.1} parent=1 // pred_fallthru
      _
    // Predicated region
    $region38: #{tpu_custom_call.1} parent=1 // pred_check
      _
    $region39: #{tpu_custom_call.1} parent=1 // pred_check_branch
      %80 = sbr.rel (0) target = $region41
    $region40: #{tpu_custom_call.1} parent=1 // pred_region
      %s82 = ssub.s32 1024, 1024
      %83 = vsyncadd [#allocation9], %s82
      %s84 = sshll.u32 [#allocation10], 4
      %s85 = int_to_ptr.vmem [resolvable:$true] %s84
      %90 = dma.hbm_to_vmem [thread:$0]  %s9, 1024, %s85, [#allocation9], 64, 64, 4
    $region41: #{tpu_custom_call.1} parent=1 // pred_fallthru
      _
    // Predicated region
    $region42: #{tpu_custom_call.1} parent=1 // pred_check
      _
    $region43: #{tpu_custom_call.1} parent=1 // pred_check_branch
      %92 = sbr.rel (0) target = $region45
    $region44: #{tpu_custom_call.1} parent=1 // pred_region
      _
    $region45: #{tpu_custom_call.1} parent=1 // pred_fallthru
      _
    // Predicated region
    $region46: #{tpu_custom_call.1} parent=1 // pred_check
      _
    $region47: #{tpu_custom_call.1} parent=1 // pred_check_branch
      %94 = sbr.rel (0) target = $region49
    $region48: #{tpu_custom_call.1} parent=1 // pred_region
      _
    $region49: #{tpu_custom_call.1} parent=1 // pred_fallthru
      _
    // Predicated region
    $region50: #{tpu_custom_call.1} parent=1 // pred_check
      _
    $region51: #{tpu_custom_call.1} parent=1 // pred_check_branch
      %96 = sbr.rel (0) target = $region53
    $region52: #{tpu_custom_call.1} parent=1 // pred_region
      _
    $region53: #{tpu_custom_call.1} parent=1 // pred_fallthru
      _
    // Predicated region
    $region54: #{tpu_custom_call.1} parent=1 // pred_check
      _
    $region55: #{tpu_custom_call.1} parent=1 // pred_check_branch
      %98 = sbr.rel (0) target = $region57
    $region56: #{tpu_custom_call.1} parent=1 // pred_region
      %99 = dma.done [#allocation4], 256
    $region57: #{tpu_custom_call.1} parent=1 // pred_fallthru
      _
    // Predicated region
    $region58: #{tpu_custom_call.1} parent=1 // pred_check
      _
    $region59: #{tpu_custom_call.1} parent=1 // pred_check_branch
      %101 = sbr.rel (0) target = $region61
    $region60: #{tpu_custom_call.1} parent=1 // pred_region
      %102 = dma.done [#allocation6], 16
    $region61: #{tpu_custom_call.1} parent=1 // pred_fallthru
      _
    // Predicated region
    $region62: #{tpu_custom_call.1} parent=1 // pred_check
      _
    $region63: #{tpu_custom_call.1} parent=1 // pred_check_branch
      %104 = sbr.rel (0) target = $region65
    $region64: #{tpu_custom_call.1} parent=1 // pred_region
      %105 = dma.done [#allocation6], 1024
    $region65: #{tpu_custom_call.1} parent=1 // pred_fallthru
      _
    // Predicated region
    $region66: #{tpu_custom_call.1} parent=1 // pred_check
      _
    $region67: #{tpu_custom_call.1} parent=1 // pred_check_branch
      %107 = sbr.rel (0) target = $region69
    $region68: #{tpu_custom_call.1} parent=1 // pred_region
      %108 = dma.done [#allocation9], 1024
    $region69: #{tpu_custom_call.1} parent=1 // pred_fallthru
      _
    // Predicated region
    $region70: #{tpu_custom_call.1} parent=1 // pred_check
      _
    $region71: #{tpu_custom_call.1} parent=1 // pred_check_branch
      %110 = sbr.rel (0) target = $region73
    $region72: #{tpu_custom_call.1} parent=1 // pred_region
      %111 = dma.done [#allocation9], 1024
    $region73: #{tpu_custom_call.1} parent=1 // pred_fallthru
      _
    %v113 = vld [vmem:[%s0] sm:$0xff]
    %v114 = vpack.c.bf16 %v113, %v113
    %v115 = vld [vmem:[#allocation3] sm:$0xf]
    %v116 = vld [vmem:[#allocation3 + $0x4] sm:$0xf]
    %v117 = vld [vmem:[#allocation3 + $0x8] sm:$0xf]
    %v118 = vld [vmem:[#allocation3 + $0xc] sm:$0xf]
    %v119 = vld [vmem:[#allocation5] sm:$0x1]
    %v121 = vlaneseq
    %v122 = vshrl.u32 %v121, 7
    %v123 = vsub.s32 0, %v122
    %v124 = vrot.slane %v119, %v123
    %v130 = vunpack.c.l.b16 %v115
    %v131 = vunpack.c.l.b16 %v116
    %v132 = vunpack.c.l.b16 %v117
    %v133 = vunpack.c.l.b16 %v118
    %v134 = vpack.c.b16 %v131, %v130
    %v135 = vpack.c.b16 %v133, %v132
    %vm138 = vcmask 261120
    %v140 = vsel %vm138, %v114, 0
    %142 = vmatprep.subr.bf16.mxu0 0
    %143 = vmatpush1.bf16.msra.mxu0 0
    %144 = vmatprep.subr.bf16.mxu0 0
    %145 = vmatpush1.bf16.msra.mxu0 0
    %146 = vmatprep.subr.bf16.mxu0 0
    %147 = vmatpush1.bf16.msra.mxu0 0
    %148 = vmatprep.subr.bf16.mxu0 0
    %149 = vmatpush1.bf16.msra.mxu0 0
    %150 = vmatprep.subr.bf16.mxu0 0
    %151 = vmatpush1.bf16.msra.mxu0 0
    %152 = vmatprep.subr.bf16.mxu0 0
    %153 = vmatpush1.bf16.msra.mxu0 0
    %154 = vmatprep.subr.bf16.mxu0 0
    %155 = vmatpush1.bf16.msra.mxu0 %v135
    %156 = vmatprep.subr.bf16.mxu0 0
    %157 = vmatpush1.bf16.msra.mxu0 %v134
    %158 = vmatprep.subr.bf16.mxu0 0
    %159 = vmatpush2.bf16.msra.mxu0 0
    %160 = vmatprep.subr.bf16.mxu0 0
    %161 = vmatpush2.bf16.msra.mxu0 0
    %162 = vmatprep.subr.bf16.mxu0 0
    %163 = vmatpush2.bf16.msra.mxu0 0
    %164 = vmatprep.subr.bf16.mxu0 0
    %165 = vmatpush2.bf16.msra.mxu0 0
    %166 = vmatprep.subr.bf16.mxu0 0
    %167 = vmatpush2.bf16.msra.mxu0 0
    %168 = vmatprep.subr.bf16.mxu0 0
    %169 = vmatpush2.bf16.msra.mxu0 0
    %170 = vmatprep.subr.bf16.mxu0 0
    %171 = vmatpush2.bf16.msra.mxu0 0
    %172 = vmatprep.subr.bf16.mxu0 0
    %173 = vmatpush2.bf16.msra.mxu0 0
    %174 = vmatprep.mubr.bf16.mxu0 0
    %175 = vmatmul.mubr.bf16.gmra.mxu0 %v140
    %v176 = vpop.f32.mrf.mxu0
    %v177 = vadd.f32 %v124, %v176
    %v178 = vpop.f32.mrf.mxu0
    %v179 = vpop.f32.mrf.mxu0
    %v180 = vpop.f32.mrf.mxu0
    %181 = vdwg.mxu0
    %vm182 = vcmp.ge.f32.partialorder %v177, 0.0
    %v183 = vmul.f32 %v177, 0.01
    %v184 = vsel %vm182, %v177, %v183
    %v185 = vpack.c.bf16 %v184, %v184
    %v186 = vld [vmem:[%s3] sm:$0xf]
    %v187 = vld [vmem:[%s3 + $0x4] sm:$0xf]
    %v188 = vld [vmem:[%s3 + $0x8] sm:$0xf]
    %v189 = vld [vmem:[%s3 + $0xc] sm:$0xf]
    %v190 = vld [vmem:[%s3 + $0x10] sm:$0xf]
    %v191 = vld [vmem:[%s3 + $0x14] sm:$0xf]
    %v192 = vld [vmem:[%s3 + $0x18] sm:$0xf]
    %v193 = vld [vmem:[%s3 + $0x1c] sm:$0xf]
    %v194 = vld [vmem:[%s3 + $0x20] sm:$0xf]
    %v195 = vld [vmem:[%s3 + $0x24] sm:$0xf]
    %v196 = vld [vmem:[%s3 + $0x28] sm:$0xf]
    %v197 = vld [vmem:[%s3 + $0x2c] sm:$0xf]
    %v198 = vld [vmem:[%s3 + $0x30] sm:$0xf]
    %v199 = vld [vmem:[%s3 + $0x34] sm:$0xf]
    %v200 = vld [vmem:[%s3 + $0x38] sm:$0xf]
    %v201 = vld [vmem:[%s3 + $0x3c] sm:$0xf]
    %v202 = vld [vmem:[%s4] sm:$0x1]
    %v204 = vlaneseq
    %v205 = vshrl.u32 %v204, 7
    %v206 = vsub.s32 0, %v205
    %v207 = vrot.slane %v202, %v206
    %v225 = vunpack.c.l.b16 %v186
    %v226 = vunpack.c.l.b16 %v187
    %v227 = vunpack.c.l.b16 %v188
    %v228 = vunpack.c.l.b16 %v189
    %v229 = vunpack.c.l.b16 %v190
    %v230 = vunpack.c.l.b16 %v191
    %v231 = vunpack.c.l.b16 %v192
    %v232 = vunpack.c.l.b16 %v193
    %v233 = vunpack.c.l.b16 %v194
    %v234 = vunpack.c.l.b16 %v195
    %v235 = vunpack.c.l.b16 %v196
    %v236 = vunpack.c.l.b16 %v197
    %v237 = vunpack.c.l.b16 %v198
    %v238 = vunpack.c.l.b16 %v199
    %v239 = vunpack.c.l.b16 %v200
    %v240 = vunpack.c.l.b16 %v201
    %v241 = vpack.c.b16 %v226, %v225
    %v242 = vpack.c.b16 %v228, %v227
    %v243 = vpack.c.b16 %v230, %v229
    %v244 = vpack.c.b16 %v232, %v231
    %v245 = vpack.c.b16 %v234, %v233
    %v246 = vpack.c.b16 %v236, %v235
    %v247 = vpack.c.b16 %v238, %v237
    %v248 = vpack.c.b16 %v240, %v239
    %257 = vmatprep.subr.bf16.mxu0 0
    %258 = vmatpush1.bf16.msra.mxu0 %v248
    %259 = vmatprep.subr.bf16.mxu0 0
    %260 = vmatpush1.bf16.msra.mxu0 %v247
    %261 = vmatprep.subr.bf16.mxu0 0
    %262 = vmatpush1.bf16.msra.mxu0 %v246
    %263 = vmatprep.subr.bf16.mxu0 0
    %264 = vmatpush1.bf16.msra.mxu0 %v245
    %265 = vmatprep.subr.bf16.mxu0 0
    %266 = vmatpush1.bf16.msra.mxu0 %v244
    %267 = vmatprep.subr.bf16.mxu0 0
    %268 = vmatpush1.bf16.msra.mxu0 %v243
    %269 = vmatprep.subr.bf16.mxu0 0
    %270 = vmatpush1.bf16.msra.mxu0 %v242
    %271 = vmatprep.subr.bf16.mxu0 0
    %272 = vmatpush1.bf16.msra.mxu0 %v241
    %273 = vmatprep.subr.bf16.mxu0 0
    %274 = vmatpush2.bf16.msra.mxu0 0
    %275 = vmatprep.subr.bf16.mxu0 0
    %276 = vmatpush2.bf16.msra.mxu0 0
    %277 = vmatprep.subr.bf16.mxu0 0
    %278 = vmatpush2.bf16.msra.mxu0 0
    %279 = vmatprep.subr.bf16.mxu0 0
    %280 = vmatpush2.bf16.msra.mxu0 0
    %281 = vmatprep.subr.bf16.mxu0 0
    %282 = vmatpush2.bf16.msra.mxu0 0
    %283 = vmatprep.subr.bf16.mxu0 0
    %284 = vmatpush2.bf16.msra.mxu0 0
    %285 = vmatprep.subr.bf16.mxu0 0
    %286 = vmatpush2.bf16.msra.mxu0 0
    %287 = vmatprep.subr.bf16.mxu0 0
    %288 = vmatpush2.bf16.msra.mxu0 0
    %289 = vmatprep.mubr.bf16.mxu0 0
    %290 = vmatmul.mubr.bf16.gmra.mxu0 %v185
    %v291 = vpop.f32.mrf.mxu0
    %v292 = vadd.f32 %v207, %v291
    %v293 = vpop.f32.mrf.mxu0
    %v294 = vpop.f32.mrf.mxu0
    %v295 = vpop.f32.mrf.mxu0
    %296 = vdwg.mxu0
    %vm297 = vcmp.ge.f32.partialorder %v292, 0.0
    %v298 = vmul.f32 %v292, 0.01
    %v299 = vsel %vm297, %v292, %v298
    %v300 = vpack.c.bf16 %v299, %v299
    %v301 = vld [vmem:[#allocation7] sm:$0xf]
    %v302 = vld [vmem:[#allocation7 + $0x4] sm:$0xf]
    %v303 = vld [vmem:[#allocation7 + $0x8] sm:$0xf]
    %v304 = vld [vmem:[#allocation7 + $0xc] sm:$0xf]
    %v305 = vld [vmem:[#allocation7 + $0x10] sm:$0xf]
    %v306 = vld [vmem:[#allocation7 + $0x14] sm:$0xf]
    %v307 = vld [vmem:[#allocation7 + $0x18] sm:$0xf]
    %v308 = vld [vmem:[#allocation7 + $0x1c] sm:$0xf]
    %v309 = vld [vmem:[#allocation7 + $0x20] sm:$0xf]
    %v310 = vld [vmem:[#allocation7 + $0x24] sm:$0xf]
    %v311 = vld [vmem:[#allocation7 + $0x28] sm:$0xf]
    %v312 = vld [vmem:[#allocation7 + $0x2c] sm:$0xf]
    %v313 = vld [vmem:[#allocation7 + $0x30] sm:$0xf]
    %v314 = vld [vmem:[#allocation7 + $0x34] sm:$0xf]
    %v315 = vld [vmem:[#allocation7 + $0x38] sm:$0xf]
    %v316 = vld [vmem:[#allocation7 + $0x3c] sm:$0xf]
    %v317 = vld [vmem:[%s6] sm:$0x1]
    %v319 = vlaneseq
    %v320 = vshrl.u32 %v319, 7
    %v321 = vsub.s32 0, %v320
    %v322 = vrot.slane %v317, %v321
    %v340 = vunpack.c.l.b16 %v301
    %v341 = vunpack.c.l.b16 %v302
    %v342 = vunpack.c.l.b16 %v303
    %v343 = vunpack.c.l.b16 %v304
    %v344 = vunpack.c.l.b16 %v305
    %v345 = vunpack.c.l.b16 %v306
    %v346 = vunpack.c.l.b16 %v307
    %v347 = vunpack.c.l.b16 %v308
    %v348 = vunpack.c.l.b16 %v309
    %v349 = vunpack.c.l.b16 %v310
    %v350 = vunpack.c.l.b16 %v311
    %v351 = vunpack.c.l.b16 %v312
    %v352 = vunpack.c.l.b16 %v313
    %v353 = vunpack.c.l.b16 %v314
    %v354 = vunpack.c.l.b16 %v315
    %v355 = vunpack.c.l.b16 %v316
    %v356 = vpack.c.b16 %v341, %v340
    %v357 = vpack.c.b16 %v343, %v342
    %v358 = vpack.c.b16 %v345, %v344
    %v359 = vpack.c.b16 %v347, %v346
    %v360 = vpack.c.b16 %v349, %v348
    %v361 = vpack.c.b16 %v351, %v350
    %v362 = vpack.c.b16 %v353, %v352
    %v363 = vpack.c.b16 %v355, %v354
    %372 = vmatprep.subr.bf16.mxu0 0
    %373 = vmatpush1.bf16.msra.mxu0 %v363
    %374 = vmatprep.subr.bf16.mxu0 0
    %375 = vmatpush1.bf16.msra.mxu0 %v362
    %376 = vmatprep.subr.bf16.mxu0 0
    %377 = vmatpush1.bf16.msra.mxu0 %v361
    %378 = vmatprep.subr.bf16.mxu0 0
    %379 = vmatpush1.bf16.msra.mxu0 %v360
    %380 = vmatprep.subr.bf16.mxu0 0
    %381 = vmatpush1.bf16.msra.mxu0 %v359
    %382 = vmatprep.subr.bf16.mxu0 0
    %383 = vmatpush1.bf16.msra.mxu0 %v358
    %384 = vmatprep.subr.bf16.mxu0 0
    %385 = vmatpush1.bf16.msra.mxu0 %v357
    %386 = vmatprep.subr.bf16.mxu0 0
    %387 = vmatpush1.bf16.msra.mxu0 %v356
    %388 = vmatprep.subr.bf16.mxu0 0
    %389 = vmatpush2.bf16.msra.mxu0 0
    %390 = vmatprep.subr.bf16.mxu0 0
    %391 = vmatpush2.bf16.msra.mxu0 0
    %392 = vmatprep.subr.bf16.mxu0 0
    %393 = vmatpush2.bf16.msra.mxu0 0
    %394 = vmatprep.subr.bf16.mxu0 0
    %395 = vmatpush2.bf16.msra.mxu0 0
    %396 = vmatprep.subr.bf16.mxu0 0
    %397 = vmatpush2.bf16.msra.mxu0 0
    %398 = vmatprep.subr.bf16.mxu0 0
    %399 = vmatpush2.bf16.msra.mxu0 0
    %400 = vmatprep.subr.bf16.mxu0 0
    %401 = vmatpush2.bf16.msra.mxu0 0
    %402 = vmatprep.subr.bf16.mxu0 0
    %403 = vmatpush2.bf16.msra.mxu0 0
    %404 = vmatprep.mubr.bf16.mxu0 0
    %405 = vmatmul.mubr.bf16.gmra.mxu0 %v300
    %v406 = vpop.f32.mrf.mxu0
    %v407 = vadd.f32 %v322, %v406
    %v408 = vpop.f32.mrf.mxu0
    %v409 = vpop.f32.mrf.mxu0
    %v410 = vpop.f32.mrf.mxu0
    %411 = vdwg.mxu0
    %vm412 = vcmp.ge.f32.partialorder %v407, 0.0
    %v413 = vmul.f32 %v407, 0.01
    %v414 = vsel %vm412, %v407, %v413
    %v415 = vpack.c.bf16 %v414, %v414
    %v416 = vld [vmem:[#allocation8] sm:$0xf]
    %v417 = vld [vmem:[#allocation8 + $0x4] sm:$0xf]
    %v418 = vld [vmem:[#allocation8 + $0x8] sm:$0xf]
    %v419 = vld [vmem:[#allocation8 + $0xc] sm:$0xf]
    %v420 = vld [vmem:[#allocation8 + $0x10] sm:$0xf]
    %v421 = vld [vmem:[#allocation8 + $0x14] sm:$0xf]
    %v422 = vld [vmem:[#allocation8 + $0x18] sm:$0xf]
    %v423 = vld [vmem:[#allocation8 + $0x1c] sm:$0xf]
    %v424 = vld [vmem:[#allocation8 + $0x20] sm:$0xf]
    %v425 = vld [vmem:[#allocation8 + $0x24] sm:$0xf]
    %v426 = vld [vmem:[#allocation8 + $0x28] sm:$0xf]
    %v427 = vld [vmem:[#allocation8 + $0x2c] sm:$0xf]
    %v428 = vld [vmem:[#allocation8 + $0x30] sm:$0xf]
    %v429 = vld [vmem:[#allocation8 + $0x34] sm:$0xf]
    %v430 = vld [vmem:[#allocation8 + $0x38] sm:$0xf]
    %v431 = vld [vmem:[#allocation8 + $0x3c] sm:$0xf]
    %v432 = vld [vmem:[%s8] sm:$0x1]
    %v434 = vlaneseq
    %v435 = vshrl.u32 %v434, 7
    %v436 = vsub.s32 0, %v435
    %v437 = vrot.slane %v432, %v436
    %v455 = vunpack.c.l.b16 %v416
    %v456 = vunpack.c.l.b16 %v417
    %v457 = vunpack.c.l.b16 %v418
    %v458 = vunpack.c.l.b16 %v419
    %v459 = vunpack.c.l.b16 %v420
    %v460 = vunpack.c.l.b16 %v421
    %v461 = vunpack.c.l.b16 %v422
    %v462 = vunpack.c.l.b16 %v423
    %v463 = vunpack.c.l.b16 %v424
    %v464 = vunpack.c.l.b16 %v425
    %v465 = vunpack.c.l.b16 %v426
    %v466 = vunpack.c.l.b16 %v427
    %v467 = vunpack.c.l.b16 %v428
    %v468 = vunpack.c.l.b16 %v429
    %v469 = vunpack.c.l.b16 %v430
    %v470 = vunpack.c.l.b16 %v431
    %v471 = vpack.c.b16 %v456, %v455
    %v472 = vpack.c.b16 %v458, %v457
    %v473 = vpack.c.b16 %v460, %v459
    %v474 = vpack.c.b16 %v462, %v461
    %v475 = vpack.c.b16 %v464, %v463
    %v476 = vpack.c.b16 %v466, %v465
    %v477 = vpack.c.b16 %v468, %v467
    %v478 = vpack.c.b16 %v470, %v469
    %487 = vmatprep.subr.bf16.mxu0 0
    %488 = vmatpush1.bf16.msra.mxu0 %v478
    %489 = vmatprep.subr.bf16.mxu0 0
    %490 = vmatpush1.bf16.msra.mxu0 %v477
    %491 = vmatprep.subr.bf16.mxu0 0
    %492 = vmatpush1.bf16.msra.mxu0 %v476
    %493 = vmatprep.subr.bf16.mxu0 0
    %494 = vmatpush1.bf16.msra.mxu0 %v475
    %495 = vmatprep.subr.bf16.mxu0 0
    %496 = vmatpush1.bf16.msra.mxu0 %v474
    %497 = vmatprep.subr.bf16.mxu0 0
    %498 = vmatpush1.bf16.msra.mxu0 %v473
    %499 = vmatprep.subr.bf16.mxu0 0
    %500 = vmatpush1.bf16.msra.mxu0 %v472
    %501 = vmatprep.subr.bf16.mxu0 0
    %502 = vmatpush1.bf16.msra.mxu0 %v471
    %503 = vmatprep.subr.bf16.mxu0 0
    %504 = vmatpush2.bf16.msra.mxu0 0
    %505 = vmatprep.subr.bf16.mxu0 0
    %506 = vmatpush2.bf16.msra.mxu0 0
    %507 = vmatprep.subr.bf16.mxu0 0
    %508 = vmatpush2.bf16.msra.mxu0 0
    %509 = vmatprep.subr.bf16.mxu0 0
    %510 = vmatpush2.bf16.msra.mxu0 0
    %511 = vmatprep.subr.bf16.mxu0 0
    %512 = vmatpush2.bf16.msra.mxu0 0
    %513 = vmatprep.subr.bf16.mxu0 0
    %514 = vmatpush2.bf16.msra.mxu0 0
    %515 = vmatprep.subr.bf16.mxu0 0
    %516 = vmatpush2.bf16.msra.mxu0 0
    %517 = vmatprep.subr.bf16.mxu0 0
    %518 = vmatpush2.bf16.msra.mxu0 0
    %519 = vmatprep.mubr.bf16.mxu0 0
    %520 = vmatmul.mubr.bf16.gmra.mxu0 %v415
    %v521 = vpop.f32.mrf.mxu0
    %v522 = vadd.f32 %v437, %v521
    %v523 = vpop.f32.mrf.mxu0
    %v524 = vpop.f32.mrf.mxu0
    %v525 = vpop.f32.mrf.mxu0
    %526 = vdwg.mxu0
    %vm527 = vcmp.ge.f32.partialorder %v522, 0.0
    %v528 = vmul.f32 %v522, 0.01
    %v529 = vsel %vm527, %v522, %v528
    %v530 = vpack.c.bf16 %v529, %v529
    %v531 = vld [vmem:[#allocation10] sm:$0xf]
    %v532 = vld [vmem:[#allocation10 + $0x4] sm:$0xf]
    %v533 = vld [vmem:[#allocation10 + $0x8] sm:$0xf]
    %v534 = vld [vmem:[#allocation10 + $0xc] sm:$0xf]
    %v535 = vld [vmem:[#allocation10 + $0x10] sm:$0xf]
    %v536 = vld [vmem:[#allocation10 + $0x14] sm:$0xf]
    %v537 = vld [vmem:[#allocation10 + $0x18] sm:$0xf]
    %v538 = vld [vmem:[#allocation10 + $0x1c] sm:$0xf]
    %v539 = vld [vmem:[#allocation10 + $0x20] sm:$0xf]
    %v540 = vld [vmem:[#allocation10 + $0x24] sm:$0xf]
    %v541 = vld [vmem:[#allocation10 + $0x28] sm:$0xf]
    %v542 = vld [vmem:[#allocation10 + $0x2c] sm:$0xf]
    %v543 = vld [vmem:[#allocation10 + $0x30] sm:$0xf]
    %v544 = vld [vmem:[#allocation10 + $0x34] sm:$0xf]
    %v545 = vld [vmem:[#allocation10 + $0x38] sm:$0xf]
    %v546 = vld [vmem:[#allocation10 + $0x3c] sm:$0xf]
    %v547 = vld [vmem:[%s10] sm:$0x1]
    %v549 = vlaneseq
    %v550 = vshrl.u32 %v549, 7
    %v551 = vsub.s32 0, %v550
    %v552 = vrot.slane %v547, %v551
    %v570 = vunpack.c.l.b16 %v531
    %v571 = vunpack.c.l.b16 %v532
    %v572 = vunpack.c.l.b16 %v533
    %v573 = vunpack.c.l.b16 %v534
    %v574 = vunpack.c.l.b16 %v535
    %v575 = vunpack.c.l.b16 %v536
    %v576 = vunpack.c.l.b16 %v537
    %v577 = vunpack.c.l.b16 %v538
    %v578 = vunpack.c.l.b16 %v539
    %v579 = vunpack.c.l.b16 %v540
    %v580 = vunpack.c.l.b16 %v541
    %v581 = vunpack.c.l.b16 %v542
    %v582 = vunpack.c.l.b16 %v543
    %v583 = vunpack.c.l.b16 %v544
    %v584 = vunpack.c.l.b16 %v545
    %v585 = vunpack.c.l.b16 %v546
    %v586 = vpack.c.b16 %v571, %v570
    %v587 = vpack.c.b16 %v573, %v572
    %v588 = vpack.c.b16 %v575, %v574
    %v589 = vpack.c.b16 %v577, %v576
    %v590 = vpack.c.b16 %v579, %v578
    %v591 = vpack.c.b16 %v581, %v580
    %v592 = vpack.c.b16 %v583, %v582
    %v593 = vpack.c.b16 %v585, %v584
    %602 = vmatprep.subr.bf16.mxu0 0
    %603 = vmatpush1.bf16.msra.mxu0 %v593
    %604 = vmatprep.subr.bf16.mxu0 0
    %605 = vmatpush1.bf16.msra.mxu0 %v592
    %606 = vmatprep.subr.bf16.mxu0 0
    %607 = vmatpush1.bf16.msra.mxu0 %v591
    %608 = vmatprep.subr.bf16.mxu0 0
    %609 = vmatpush1.bf16.msra.mxu0 %v590
    %610 = vmatprep.subr.bf16.mxu0 0
    %611 = vmatpush1.bf16.msra.mxu0 %v589
    %612 = vmatprep.subr.bf16.mxu0 0
    %613 = vmatpush1.bf16.msra.mxu0 %v588
    %614 = vmatprep.subr.bf16.mxu0 0
    %615 = vmatpush1.bf16.msra.mxu0 %v587
    %616 = vmatprep.subr.bf16.mxu0 0
    %617 = vmatpush1.bf16.msra.mxu0 %v586
    %618 = vmatprep.subr.bf16.mxu0 0
    %619 = vmatpush2.bf16.msra.mxu0 0
    %620 = vmatprep.subr.bf16.mxu0 0
    %621 = vmatpush2.bf16.msra.mxu0 0
    %622 = vmatprep.subr.bf16.mxu0 0
    %623 = vmatpush2.bf16.msra.mxu0 0
    %624 = vmatprep.subr.bf16.mxu0 0
    %625 = vmatpush2.bf16.msra.mxu0 0
    %626 = vmatprep.subr.bf16.mxu0 0
    %627 = vmatpush2.bf16.msra.mxu0 0
    %628 = vmatprep.subr.bf16.mxu0 0
    %629 = vmatpush2.bf16.msra.mxu0 0
    %630 = vmatprep.subr.bf16.mxu0 0
    %631 = vmatpush2.bf16.msra.mxu0 0
    %632 = vmatprep.subr.bf16.mxu0 0
    %633 = vmatpush2.bf16.msra.mxu0 0
    %634 = vmatprep.mubr.bf16.mxu0 0
    %635 = vmatmul.mubr.bf16.gmra.mxu0 %v530
    %v636 = vpop.f32.mrf.mxu0
    %v637 = vadd.f32 %v552, %v636
    %v638 = vpop.f32.mrf.mxu0
    %v639 = vpop.f32.mrf.mxu0
    %v640 = vpop.f32.mrf.mxu0
    %641 = vdwg.mxu0
    %vm642 = vcmp.ge.f32.partialorder %v637, 0.0
    %v643 = vmul.f32 %v637, 0.01
    %v644 = vsel %vm642, %v637, %v643
    %v645 = vpack.c.bf16 %v644, %v644
    %v646 = vld [vmem:[%s11] sm:$0xf]
    %v647 = vld [vmem:[%s11 + $0x4] sm:$0xf]
    %v648 = vld [vmem:[%s11 + $0x8] sm:$0xf]
    %v649 = vld [vmem:[%s11 + $0xc] sm:$0xf]
    %v650 = vld [vmem:[%s11 + $0x10] sm:$0xf]
    %v651 = vld [vmem:[%s11 + $0x14] sm:$0xf]
    %v652 = vld [vmem:[%s11 + $0x18] sm:$0xf]
    %v653 = vld [vmem:[%s11 + $0x1c] sm:$0xf]
    %v654 = vld [vmem:[%s11 + $0x20] sm:$0xf]
    %v655 = vld [vmem:[%s11 + $0x24] sm:$0xf]
    %v656 = vld [vmem:[%s11 + $0x28] sm:$0xf]
    %v657 = vld [vmem:[%s11 + $0x2c] sm:$0xf]
    %v658 = vld [vmem:[%s11 + $0x30] sm:$0xf]
    %v659 = vld [vmem:[%s11 + $0x34] sm:$0xf]
    %v660 = vld [vmem:[%s11 + $0x38] sm:$0xf]
    %v661 = vld [vmem:[%s11 + $0x3c] sm:$0xf]
    %v662 = vld [vmem:[#allocation2] sm:$0x1]
    %v664 = vlaneseq
    %v665 = vshrl.u32 %v664, 7
    %v666 = vsub.s32 0, %v665
    %v667 = vrot.slane %v662, %v666
    %v685 = vunpack.c.l.b16 %v646
    %v686 = vunpack.c.l.b16 %v647
    %v687 = vunpack.c.l.b16 %v648
    %v688 = vunpack.c.l.b16 %v649
    %v689 = vunpack.c.l.b16 %v650
    %v690 = vunpack.c.l.b16 %v651
    %v691 = vunpack.c.l.b16 %v652
    %v692 = vunpack.c.l.b16 %v653
    %v693 = vunpack.c.l.b16 %v654
    %v694 = vunpack.c.l.b16 %v655
    %v695 = vunpack.c.l.b16 %v656
    %v696 = vunpack.c.l.b16 %v657
    %v697 = vunpack.c.l.b16 %v658
    %v698 = vunpack.c.l.b16 %v659
    %v699 = vunpack.c.l.b16 %v660
    %v700 = vunpack.c.l.b16 %v661
    %v701 = vpack.c.b16 %v686, %v685
    %v702 = vpack.c.b16 %v688, %v687
    %v703 = vpack.c.b16 %v690, %v689
    %v704 = vpack.c.b16 %v692, %v691
    %v705 = vpack.c.b16 %v694, %v693
    %v706 = vpack.c.b16 %v696, %v695
    %v707 = vpack.c.b16 %v698, %v697
    %v708 = vpack.c.b16 %v700, %v699
    %717 = vmatprep.subr.bf16.mxu0 0
    %718 = vmatpush1.bf16.msra.mxu0 %v708
    %719 = vmatprep.subr.bf16.mxu0 0
    %720 = vmatpush1.bf16.msra.mxu0 %v707
    %721 = vmatprep.subr.bf16.mxu0 0
    %722 = vmatpush1.bf16.msra.mxu0 %v706
    %723 = vmatprep.subr.bf16.mxu0 0
    %724 = vmatpush1.bf16.msra.mxu0 %v705
    %725 = vmatprep.subr.bf16.mxu0 0
    %726 = vmatpush1.bf16.msra.mxu0 %v704
    %727 = vmatprep.subr.bf16.mxu0 0
    %728 = vmatpush1.bf16.msra.mxu0 %v703
    %729 = vmatprep.subr.bf16.mxu0 0
    %730 = vmatpush1.bf16.msra.mxu0 %v702
    %731 = vmatprep.subr.bf16.mxu0 0
    %732 = vmatpush1.bf16.msra.mxu0 %v701
    %733 = vmatprep.subr.bf16.mxu0 0
    %734 = vmatpush2.bf16.msra.mxu0 0
    %735 = vmatprep.subr.bf16.mxu0 0
    %736 = vmatpush2.bf16.msra.mxu0 0
    %737 = vmatprep.subr.bf16.mxu0 0
    %738 = vmatpush2.bf16.msra.mxu0 0
    %739 = vmatprep.subr.bf16.mxu0 0
    %740 = vmatpush2.bf16.msra.mxu0 0
    %741 = vmatprep.subr.bf16.mxu0 0
    %742 = vmatpush2.bf16.msra.mxu0 0
    %743 = vmatprep.subr.bf16.mxu0 0
    %744 = vmatpush2.bf16.msra.mxu0 0
    %745 = vmatprep.subr.bf16.mxu0 0
    %746 = vmatpush2.bf16.msra.mxu0 0
    %747 = vmatprep.subr.bf16.mxu0 0
    %748 = vmatpush2.bf16.msra.mxu0 0
    %749 = vmatprep.mubr.bf16.mxu0 0
    %750 = vmatmul.mubr.bf16.gmra.mxu0 %v645
    %v751 = vpop.f32.mrf.mxu0
    %v752 = vadd.f32 %v667, %v751
    %v753 = vpop.f32.mrf.mxu0
    %v754 = vpop.f32.mrf.mxu0
    %v755 = vpop.f32.mrf.mxu0
    %756 = vdwg.mxu0
    %v757 = vtanh.pop %v752
    %vm758 = vcmask 7168
    %759 = vst.msk [vmem:[%s13] sm:$0xff] %vm758, %v757
    // Predicated region
    $region74: #{tpu_custom_call.1} parent=1 // pred_check
      _
    $region75: #{tpu_custom_call.1} parent=1 // pred_check_branch
      %761 = sbr.rel (0) target = $region77
    $region76: #{tpu_custom_call.1} parent=1 // pred_region
      _
    $region77: #{tpu_custom_call.1} parent=1 // pred_fallthru
      _
    // Predicated region
    $region78: #{tpu_custom_call.1} parent=1 // pred_check
      _
    $region79: #{tpu_custom_call.1} parent=1 // pred_check_branch
      %763 = sbr.rel (0) target = $region81
    $region80: #{tpu_custom_call.1} parent=1 // pred_region
      _
    $region81: #{tpu_custom_call.1} parent=1 // pred_fallthru
      _
    %764 = vsyncpa [#allocation4], 1
    %765 = vsyncpa [#allocation6], 1
    %766 = vsyncpa [#allocation9], 1

</llo_original>
